<compile_context>
chip_gen: v5e
topology: v5e:2x2
jax: 0.10.0
libtpu: 0.0.40
codegen_flags: <defaults>
</compile_context>

<pallas_src>
import functools

import jax
import jax.numpy as jnp
from jax import lax
from jax.experimental import pallas as pl
from jax.experimental.pallas import tpu as pltpu


def _make_kernel(has_sbias):
    """Build the streaming bilinear-score kernel.

    Kernel refs:
      b_ref:  (1,)       SMEM   scalar bias
      v_ref:  (1, n_h)   VMEM   precomputed v = W @ c (resident across grid)
      hp_ref: (TM, n_h)  VMEM   positive-embedding tile (native dtype)
      hm_ref: (TM, n_h)  VMEM   negative-embedding tile (native dtype)
      sb_ref: (2, TM)    VMEM   optional structural biases (row0/row1)
      o_ref:  (2, TM)    VMEM   lane-dense scores (row 0 = sc_1, row 1 = sc_2)
    """

    def kernel(b_ref, v_ref, hp_ref, hm_ref, *rest):
        if has_sbias:
            sb_ref, o_ref = rest
        else:
            (o_ref,) = rest
        v = v_ref[...]                                   # (1, n_h) f32
        bias = b_ref[0]                                  # scalar from SMEM
        hp = hp_ref[...].astype(jnp.float32)             # in-kernel cast (cheap VPU)
        hm = hm_ref[...].astype(jnp.float32)
        sc1 = jnp.sum(hp * v, axis=-1) + bias            # (TM,) VPU mul + XLU reduce
        sc2 = jnp.sum(hm * v, axis=-1) + bias            # (TM,)
        out = jnp.concatenate([sc1[None, :], sc2[None, :]], axis=0)  # (2, TM)
        if has_sbias:
            out = out + sb_ref[...]
        o_ref[...] = out                                 # lane-dense (2, TM) store

    return kernel


def _plan_tiling(n_rows, n_h, h_itemsize):
    """Pick (tile_rows, input_buffer_depth, vmem_limit_bytes).

    Accounts for VMEM lane padding (minor dim -> 128) and sublane padding
    (second-minor -> 8), the double-buffered (2, TM) output, the optional
    s_bias stream and the resident v vector.
    """
    padded_nh = ((n_h + 127) // 128) * 128
    total_h_bytes = 2 * n_rows * padded_nh * h_itemsize

    if total_h_bytes <= 512 * 1024:
        # Tiny problem: single full-extent block; per-step overhead dominates
        # and there is nothing worth sharding across TensorCores.
        tm, buffers = n_rows, 2
    else:
        buffers = 3                                    # deeper pipelining (v7x)
        per_row = 2 * buffers * padded_nh * h_itemsize
        budget_rows = max(1, (12 * 1024 * 1024) // per_row)   # ~12 MiB of h tiles
        # >= ~4 grid steps so megacore sharding + double buffering have work;
        # cap at 1024 rows (v6e roofline plateaus well before that).
        tm = min(budget_rows, 1024, max(1, n_rows // 4))
        tm = max(128, (tm // 128) * 128)               # lane-dense output blocks
        if 2 * buffers * tm * padded_nh * h_itemsize > 16 * 1024 * 1024:
            buffers = 2                                # very large n_h: fewer buffers
        tm = min(tm, n_rows)

    padded_tm = ((max(tm, 1) + 127) // 128) * 128
    h_bytes = 2 * buffers * tm * padded_nh * h_itemsize
    out_bytes = 2 * 8 * padded_tm * 4                  # (2,TM) f32, 2 bufs, 8-sublane pad
    sb_bytes = out_bytes                               # optional (2,TM) s_bias stream
    v_bytes = 8 * padded_nh * 4
    footprint = h_bytes + out_bytes + sb_bytes + v_bytes

    vmem_limit = footprint + 4 * 1024 * 1024           # headroom for internal scratch
    vmem_limit = max(vmem_limit, 16 * 1024 * 1024)     # never below v5e's default
    if vmem_limit > 32 * 1024 * 1024:
        # TODO(synk): n_h large enough to land here would need column tiling of
        # the reduction to stay inside v7x's 64 MiB VMEM; DGI uses n_h <= 512.
        vmem_limit = min(vmem_limit, 48 * 1024 * 1024)
    return tm, buffers, int(vmem_limit)


def _h_block_spec(tm, n_h, buffers):
    """(TM, n_h) row-tile spec; request deeper pipelining when useful."""
    index_map = lambda i: (i, 0)
    if buffers > 2 and hasattr(pl, "Buffered"):
        try:
            return pl.BlockSpec((tm, n_h), index_map,
                                pipeline_mode=pl.Buffered(buffers))
        except TypeError:  # older BlockSpec without pipeline_mode kwarg
            pass
    return pl.BlockSpec((tm, n_h), index_map)


@jax.jit
def discriminator_forward(c, h_pl, h_mi, weight, bias,
                          s_bias1=None, s_bias2=None):
    """Pallas port of Discriminator.forward.

    c:      (n_h,)         summary vector
    h_pl:   (N, n_h)       positive embeddings (f32 or bf16; streamed natively)
    h_mi:   (N, n_h)       negative embeddings
    weight: (1, n_h, n_h)  nn.Bilinear weight
    bias:   (1,)           nn.Bilinear bias
    returns logits of shape (2N,)  ==  concat(sc_1, sc_2)
    """
    n, n_h = h_pl.shape

    w = weight.reshape(n_h, n_h).astype(jnp.float32)
    c32 = c.reshape(n_h).astype(jnp.float32)
    # Precompute v = W @ c once (tiny O(n_h^2)); kernel becomes O(N*n_h) streaming.
    v = jnp.dot(w, c32, precision=lax.Precision.HIGHEST).reshape(1, n_h)
    b = bias.reshape(1).astype(jnp.float32)

    hm = h_mi.astype(h_pl.dtype)        # keep both h streams in the same native dtype
    h_itemsize = jnp.dtype(h_pl.dtype).itemsize

    tm, buffers, vmem_limit = _plan_tiling(n, n_h, h_itemsize)
    grid = (pl.cdiv(n, tm),)

    has_sbias = (s_bias1 is not None) or (s_bias2 is not None)

    in_specs = [
        pl.BlockSpec(memory_space=pltpu.MemorySpace.SMEM),   # bias scalar
        pl.BlockSpec((1, n_h), lambda i: (0, 0)),            # v, resident in VMEM
        _h_block_spec(tm, n_h, buffers),                     # h_pl row tile
        _h_block_spec(tm, n_h, buffers),                     # h_mi row tile
    ]
    inputs = [b, v, h_pl, hm]

    if has_sbias:
        sb1 = (s_bias1 if s_bias1 is not None
               else jnp.zeros((n,), jnp.float32)).reshape(n).astype(jnp.float32)
        sb2 = (s_bias2 if s_bias2 is not None
               else jnp.zeros((n,), jnp.float32)).reshape(n).astype(jnp.float32)
        sb = jnp.stack([sb1, sb2], axis=0)                   # (2, N)
        in_specs.append(pl.BlockSpec((2, tm), lambda i: (0, i)))
        inputs.append(sb)

    scores = pl.pallas_call(
        _make_kernel(has_sbias),
        out_shape=jax.ShapeDtypeStruct((2, n), jnp.float32),
        grid=grid,
        in_specs=in_specs,
        out_specs=pl.BlockSpec((2, tm), lambda i: (0, i)),   # lane-dense score blocks
        compiler_params=pltpu.CompilerParams(
            dimension_semantics=("parallel",),               # shard rows on v7x TCs
            vmem_limit_bytes=vmem_limit,
        ),
    )(*inputs)

    # Row 0 = sc_1, row 1 = sc_2  ->  flatten gives concat(sc_1, sc_2).
    return scores.reshape(2 * n)


def init_discriminator_params(key, n_h):
    """Deterministic xavier_uniform init matching PyTorch's Bilinear init."""
    # torch xavier_uniform on weight of shape (1, n_h, n_h):
    #   fan_in = n_h * n_h, fan_out = 1 * n_h
    fan_in = n_h * n_h
    fan_out = 1 * n_h
    bound = jnp.sqrt(6.0 / (fan_in + fan_out))
    weight = jax.random.uniform(key, (1, n_h, n_h), jnp.float32,
                                minval=-bound, maxval=bound)
    bias = jnp.zeros((1,), jnp.float32)
    return weight, bias


def _ref_scores(h, w0, c, bias0):
    """Pure-JAX reference: sc[i] = h[i] . (W @ c) + b, full f32 precision."""
    v = jnp.dot(w0, c, precision=lax.Precision.HIGHEST)
    return jnp.sum(h.astype(jnp.float32) * v[None, :], axis=-1) + bias0


if __name__ == "__main__":
    key = jax.random.PRNGKey(0)
    k_w, k_c, k_pl, k_mi, k_sb, k_big = jax.random.split(key, 6)

    # ---------- small f32 test (module's default dtype) ----------
    N, n_h = 8, 32
    weight, bias = init_discriminator_params(k_w, n_h)
    c = jax.random.normal(k_c, (n_h,), jnp.float32)
    h_pl = jax.random.normal(k_pl, (N, n_h), jnp.float32)
    h_mi = jax.random.normal(k_mi, (N, n_h), jnp.float32)

    logits = jax.block_until_ready(
        discriminator_forward(c, h_pl, h_mi, weight, bias))
    ref1 = _ref_scores(h_pl, weight[0], c, bias[0])
    ref2 = _ref_scores(h_mi, weight[0], c, bias[0])
    ref = jnp.concatenate([ref1, ref2])
    assert logits.shape == (2 * N,)
    assert jnp.allclose(logits, ref, atol=1e-4, rtol=1e-4)

    # ---------- with optional structural biases s_bias1 / s_bias2 ----------
    s_b1 = jax.random.normal(k_sb, (N,), jnp.float32)
    s_b2 = 0.5 * s_b1
    logits_b = jax.block_until_ready(
        discriminator_forward(c, h_pl, h_mi, weight, bias, s_b1, s_b2))
    ref_b = jnp.concatenate([ref1 + s_b1, ref2 + s_b2])
    assert jnp.allclose(logits_b, ref_b, atol=1e-4, rtol=1e-4)

    # ---------- bf16 embeddings, multi-tile grid (Buffered(3) + megacore path) ----------
    N2, nh2 = 2048, 128
    w2, b2 = init_discriminator_params(k_w, nh2)
    c2 = jax.random.normal(k_c, (nh2,), jnp.float32)
    hp2 = jax.random.normal(k_big, (N2, nh2), jnp.float32).astype(jnp.bfloat16)
    hm2 = (jax.random.normal(k_mi, (N2, nh2), jnp.float32) * 0.5).astype(jnp.bfloat16)
    logits2 = jax.block_until_ready(
        discriminator_forward(c2, hp2, hm2, w2, b2))
    ref2a = _ref_scores(hp2, w2[0], c2, b2[0])
    ref2b = _ref_scores(hm2, w2[0], c2, b2[0])
    ref_big = jnp.concatenate([ref2a, ref2b])
    assert logits2.shape == (2 * N2,)
    assert jnp.allclose(logits2, ref_big, atol=2e-3, rtol=2e-3)

    print("KERNEL_OK")
</pallas_src>

<mosaic_0001>
module attributes {stable_mosaic.version = 11 : i64} {
  func.func @kernel(%arg0: i32, %arg1: memref<1xf32, #tpu.memory_space<smem>>, %arg2: memref<1x32xf32, #tpu.memory_space<vmem>>, %arg3: memref<8x32xf32, #tpu.memory_space<vmem>>, %arg4: memref<8x32xf32, #tpu.memory_space<vmem>>, %arg5: memref<2x8xf32, #tpu.memory_space<vmem>>) attributes {dimension_semantics = [#tpu.dimension_semantics<parallel>], iteration_bounds = array<i64: 1>, scalar_prefetch = 0 : i64, scratch_operands = 0 : i64, tpu.core_type = #tpu.core_type<tc>, window_params = [{transform_indices = @transform_0, window_bounds = array<i64: 1>}, {pipeline_mode = #tpu.pipeline_mode<synchronous>, transform_indices = @transform_1, window_bounds = array<i64: 1, 32>}, {transform_indices = @transform_2, window_bounds = array<i64: 8, 32>}, {transform_indices = @transform_3, window_bounds = array<i64: 8, 32>}, {transform_indices = @transform_4, window_bounds = array<i64: 2, 8>}]} {
    %c0 = arith.constant 0 : index
    %c0_0 = arith.constant 0 : index
    %0 = vector.load %arg2[%c0, %c0_0] : memref<1x32xf32, #tpu.memory_space<vmem>>, vector<1x32xf32>
    %c0_1 = arith.constant 0 : index
    %1 = memref.load %arg1[%c0_1] : memref<1xf32, #tpu.memory_space<smem>>
    %c0_2 = arith.constant 0 : index
    %c0_3 = arith.constant 0 : index
    %2 = vector.load %arg3[%c0_2, %c0_3] : memref<8x32xf32, #tpu.memory_space<vmem>>, vector<8x32xf32>
    %c0_4 = arith.constant 0 : index
    %c0_5 = arith.constant 0 : index
    %3 = vector.load %arg4[%c0_4, %c0_5] : memref<8x32xf32, #tpu.memory_space<vmem>>, vector<8x32xf32>
    %4 = vector.broadcast %0 : vector<1x32xf32> to vector<8x32xf32>
    %5 = arith.mulf %2, %4 : vector<8x32xf32>
    %cst = arith.constant dense<0.000000e+00> : vector<8xf32>
    %6 = vector.multi_reduction <add>, %5, %cst [1] : vector<8x32xf32> to vector<8xf32>
    %7 = vector.broadcast %1 : f32 to vector<8xf32>
    %8 = arith.addf %6, %7 : vector<8xf32>
    %9 = vector.broadcast %0 : vector<1x32xf32> to vector<8x32xf32>
    %10 = arith.mulf %3, %9 : vector<8x32xf32>
    %cst_6 = arith.constant dense<0.000000e+00> : vector<8xf32>
    %11 = vector.multi_reduction <add>, %10, %cst_6 [1] : vector<8x32xf32> to vector<8xf32>
    %12 = vector.broadcast %1 : f32 to vector<8xf32>
    %13 = arith.addf %11, %12 : vector<8xf32>
    %14 = vector.shape_cast %8 : vector<8xf32> to vector<1x8xf32>
    %15 = vector.shape_cast %13 : vector<8xf32> to vector<1x8xf32>
    %16 = tpu.concatenate %14, %15 in 0 : vector<1x8xf32>, vector<1x8xf32> -> vector<2x8xf32>
    %c0_7 = arith.constant 0 : index
    %c0_8 = arith.constant 0 : index
    %17 = vector.load %arg5[%c0_7, %c0_8] : memref<2x8xf32, #tpu.memory_space<vmem>>, vector<2x8xf32>
    tpu.vector_store %arg5[%c0_7, %c0_8], %16 {strides = array<i32>} : memref<2x8xf32, #tpu.memory_space<vmem>>, vector<2x8xf32>,
    return
  }
  func.func @transform_0(%arg0: i32) -> i32 {
    %c0_i32 = arith.constant 0 : i32
    %c0_i32_0 = arith.constant 0 : i32
    return %c0_i32 : i32
  }
  func.func @transform_1(%arg0: i32) -> (i32, i32) {
    %c0_i32 = arith.constant 0 : i32
    %c0_i32_0 = arith.constant 0 : i32
    %c0_i32_1 = arith.constant 0 : i32
    return %c0_i32, %c0_i32_0 : i32, i32
  }
  func.func @transform_2(%arg0: i32) -> (i32, i32) {
    %c0_i32 = arith.constant 0 : i32
    %c0_i32_0 = arith.constant 0 : i32
    return %arg0, %c0_i32 : i32, i32
  }
  func.func @transform_3(%arg0: i32) -> (i32, i32) {
    %c0_i32 = arith.constant 0 : i32
    %c0_i32_0 = arith.constant 0 : i32
    return %arg0, %c0_i32 : i32, i32
  }
  func.func @transform_4(%arg0: i32) -> (i32, i32) {
    %c0_i32 = arith.constant 0 : i32
    %c0_i32_0 = arith.constant 0 : i32
    return %c0_i32, %arg0 : i32, i32
  }
}

</mosaic_0001>

<llo_original>
// kernel: discriminator_forward.1
$region0: #{discriminator_forward.1}
  #allocation0 [shape = 'u32[]', space=smem, size = 0x4, offset = 0x4, fixed_abs, tag = 'smem constant byte address 0x4 - core index']
  #allocation1 [shape = 'u32[72,128]{1,0:T(1,128)}', space=vmem, size = 0x9000, scoped, tag = 'internal scratch']
  #allocation2 [shape = 'f32[1]{0:T(128)S(6)}', space=smem, size = 0x200, scoped, tag = 'scoped memory for discriminator_forward.1']
  %s0 = inlined_call_operand.<no memory space> [shape: f32[1], index: 0, kind: input, shape index: {}]
  %s1 = inlined_call_operand.vmem [shape: f32[1,32], index: 1, kind: input, shape index: {}]
  %s2 = inlined_call_operand.vmem [shape: f32[8,32], index: 2, kind: input, shape index: {}]
  %s3 = inlined_call_operand.vmem [shape: f32[8,32], index: 3, kind: input, shape index: {}]
  %s4 = inlined_call_operand.vmem [shape: f32[2,8], index: 4, kind: output, shape index: {}]
  %s5 = sld [smem:[#allocation0]]
  $region26: #{discriminator_forward.1} parent=0
    _
  %s7 = ssub.s32 1, %s5
  %s8 = scalar_select 0, %s7, %s5
  %9 = sst [smem:[#allocation2]] %s0
  // Predicated region
  $region2: #{discriminator_forward.1} parent=0 // pred_check
    _
  $region3: #{discriminator_forward.1} parent=0 // pred_check_branch
    %11 = sbr.rel (0) target = $region5
  $region4: #{discriminator_forward.1} parent=0 // pred_region
    _
  $region5: #{discriminator_forward.1} parent=0 // pred_fallthru
    _
  // Predicated region
  $region6: #{discriminator_forward.1} parent=0 // pred_check
    _
  $region7: #{discriminator_forward.1} parent=0 // pred_check_branch
    %13 = sbr.rel (0) target = $region9
  $region8: #{discriminator_forward.1} parent=0 // pred_region
    _
  $region9: #{discriminator_forward.1} parent=0 // pred_fallthru
    _
  // Predicated region
  $region10: #{discriminator_forward.1} parent=0 // pred_check
    _
  $region11: #{discriminator_forward.1} parent=0 // pred_check_branch
    %15 = sbr.rel (0) target = $region13
  $region12: #{discriminator_forward.1} parent=0 // pred_region
    _
  $region13: #{discriminator_forward.1} parent=0 // pred_fallthru
    _
  // Predicated region
  $region14: #{discriminator_forward.1} parent=0 // pred_check
    _
  $region15: #{discriminator_forward.1} parent=0 // pred_check_branch
    %17 = sbr.rel (0) target = $region17
  $region16: #{discriminator_forward.1} parent=0 // pred_region
    _
  $region17: #{discriminator_forward.1} parent=0 // pred_fallthru
    _
  %v18 = vld [vmem:[%s1] sm:$0x1]
  %s19 = sld [smem:[#allocation2]]
  %v20 = vld [vmem:[%s2] sm:$0xff]
  %v21 = vld [vmem:[%s3] sm:$0xff]
  %v23 = vperm.slane %v18, 0
  %v25 = vmul.f32 %v20, %v23
  %vm26 = vcmask 261120
  %v27 = vsel %vm26, %v25, 0.0
  %28 = vadd.xlane.f32.xlu0 %v27
  %v29 = vpop.xlane.xlu0 %28
  %v30 = vstv %s19
  %v31 = vadd.f32 %v29, %v30
  %v32 = vmul.f32 %v21, %v23
  %v33 = vsel %vm26, %v32, 0.0
  %34 = vadd.xlane.f32.xlu0 %v33
  %v35 = vpop.xlane.xlu0 %34
  %v36 = vadd.f32 %v35, %v30
  %v38 = vlaneseq
  %v39 = vand.u32 %v38, 127
  %v40 = vperm.slane %v31, %v39
  %v43 = vperm.slane %v36, %v39
  %vm45 = vcmask 1040384
  %v46 = vsel %vm45, %v40, %v43
  %vm47 = vcmask 58368
  %48 = vst.msk [vmem:[%s4] sm:$0x3] %vm47, %v46
  // Predicated region
  $region18: #{discriminator_forward.1} parent=0 // pred_check
    _
  $region19: #{discriminator_forward.1} parent=0 // pred_check_branch
    %50 = sbr.rel (0) target = $region21
  $region20: #{discriminator_forward.1} parent=0 // pred_region
    _
  $region21: #{discriminator_forward.1} parent=0 // pred_fallthru
    _
  // Predicated region
  $region22: #{discriminator_forward.1} parent=0 // pred_check
    _
  $region23: #{discriminator_forward.1} parent=0 // pred_check_branch
    %52 = sbr.rel (0) target = $region25
  $region24: #{discriminator_forward.1} parent=0 // pred_region
    _
  $region25: #{discriminator_forward.1} parent=0 // pred_fallthru
    _

</llo_original>
